<compile_context>
chip_gen: v6e
topology: v6e:2x2x1
jax: 0.10.0
libtpu: 0.0.40
codegen_flags: <defaults>
</compile_context>

<pallas_src>
import functools

import jax
import jax.numpy as jnp
from jax import lax
from jax.experimental import pallas as pl
from jax.experimental.pallas import tpu as pltpu


def _residual_block_kernel(W, PAD, xi_ref, x_ref, w1_ref, b1_ref, w2_ref, b2_ref,
                           out_ref, pad_ref, col_ref):
    # xi_ref : (1, H*W) int32       x-coordinate (p mod W) of every flattened pixel
    # x_ref  : (1, C, H*W)          input image block, pixels on the lane axis
    # w*_ref : (C, 9*C)             im2col weights, K ordered as (ky*3+kx)*C + ci
    # b*_ref : (C, 1)
    # out_ref: (1, C, H*W)
    # pad_ref: (C, PAD + H*W + PAD) f32 staging; zeroed, lane-aligned ends provide the
    #                               conv zero-padding for the flattened-pixel tap shifts
    # col_ref: (9*C, H*W) f32       im2col buffer (lane-dense strips), reused by both convs
    C = x_ref.shape[1]
    HW = x_ref.shape[2]

    # Re-zero the two PAD-wide ends every grid step (two tiny lane-aligned stores), so the
    # kernel stays correct when the batch axis is sharded across cores.
    pad_ref[:, 0:PAD] = jnp.zeros((C, PAD), jnp.float32)
    pad_ref[:, PAD + HW:PAD + HW + PAD] = jnp.zeros((C, PAD), jnp.float32)

    x = x_ref[0].astype(jnp.float32)                       # (C, HW)
    xi = xi_ref[...]                                       # (1, HW) int32

    def conv3x3(src, w_ref, b_ref):
        """conv2d(src, w, stride=1, padding=1) + b as ONE (C,9C)@(9C,HW) MXU matmul."""
        pad_ref[:, PAD:PAD + HW] = src                     # lane-aligned interior write
        for ky in range(3):
            for kx in range(3):
                dy, dx = ky - 1, kx - 1
                s = dy * W + dx                            # flattened-pixel shift
                # Vertical out-of-bounds pixels land in the zeroed ends of pad_ref.
                tap = pad_ref[:, PAD + s:PAD + s + HW]     # (C, HW) static-offset load
                # Horizontal out-of-bounds (row wrap-around) is masked via xi.
                if dx == -1:
                    tap = jnp.where(xi >= 1, tap, 0.0)
                elif dx == 1:
                    tap = jnp.where(xi <= W - 2, tap, 0.0)
                t = ky * 3 + kx
                col_ref[t * C:(t + 1) * C, :] = tap        # lane-dense strip store
        h = jnp.dot(w_ref[...], col_ref[...], preferred_element_type=jnp.float32)
        return h + b_ref[...]                              # bias broadcast along lanes

    h1 = jnp.maximum(conv3x3(x, w1_ref, b1_ref), 0.0)      # conv1 + ReLU
    h2 = conv3x3(h1, w2_ref, b2_ref)                       # conv2 + bias
    out_ref[0] = jnp.maximum(x + h2, 0.0).astype(out_ref.dtype)   # residual add + ReLU


def _round_up(v, m):
    return (v + m - 1) // m * m


def _vmem_bytes(shape, itemsize):
    """VMEM footprint of one buffer with dtype-dependent (sublane, 128) tiling."""
    sub = 8 * max(1, 4 // itemsize)          # 8 for f32, 16 for bf16, 32 for int8/fp8
    if len(shape) == 1:
        return _round_up(shape[0] * itemsize, 512)
    lead = 1
    for d in shape[:-2]:
        lead *= d
    return lead * _round_up(shape[-2], sub) * _round_up(shape[-1], 128) * itemsize


def _vmem_capacity_bytes():
    try:
        return int(pltpu.get_tpu_info().vmem_capacity_bytes)
    except Exception:
        return 64 * 2 ** 20                  # conservative fallback (v7x per-TC VMEM)


@jax.jit
def residual_block(x_nchw, w1, b1, w2, b2):
    """x_nchw: (N, C, H, W).  w: (Cout, Cin, 3, 3) PyTorch layout.  b: (Cout,)."""
    N, C, H, W = x_nchw.shape
    HW = H * W
    PAD = _round_up(W + 1, 128)              # lane-aligned zero padding for pixel shifts

    x = x_nchw.reshape(N, C, HW)             # free: NCHW is already pixel-contiguous
    # (Cout, Cin, kh, kw) -> (Cout, kh, kw, Cin) -> (Cout, 9*Cin) im2col weights,
    # K ordered as (ky*3+kx)*Cin + ci to match the kernel's col layout.
    w1r = jnp.transpose(w1, (0, 2, 3, 1)).reshape(C, 9 * C).astype(jnp.float32)
    w2r = jnp.transpose(w2, (0, 2, 3, 1)).reshape(C, 9 * C).astype(jnp.float32)
    b1r = b1.reshape(C, 1).astype(jnp.float32)
    b2r = b2.reshape(C, 1).astype(jnp.float32)
    xi = (jnp.arange(HW, dtype=jnp.int32) % W).reshape(1, HW)   # x-coordinate table

    itemsize = x.dtype.itemsize
    footprint = (
        2 * 2 * _vmem_bytes((1, C, HW), itemsize)      # double-buffered x and out blocks
        + 2 * _vmem_bytes((1, HW), 4)                  # xi table
        + 2 * 2 * _vmem_bytes((C, 9 * C), 4)           # w1, w2
        + 2 * 2 * _vmem_bytes((C, 1), 4)               # b1, b2
        + _vmem_bytes((C, 2 * PAD + HW), 4)            # zero-padded pixel staging scratch
        + _vmem_bytes((9 * C, HW), 4))                 # im2col scratch
    cap = _vmem_capacity_bytes()
    vmem_limit = int(min(3 * cap // 4, max(8 * 2 ** 20, 2 * footprint)))

    kernel = functools.partial(_residual_block_kernel, W, PAD)

    out_flat = pl.pallas_call(
        kernel,
        out_shape=jax.ShapeDtypeStruct((N, C, HW), x_nchw.dtype),
        grid=(N,),
        in_specs=[
            pl.BlockSpec((1, HW), lambda b: (0, 0)),           # xi
            pl.BlockSpec((1, C, HW), lambda b: (b, 0, 0)),     # x
            pl.BlockSpec((C, 9 * C), lambda b: (0, 0)),        # w1
            pl.BlockSpec((C, 1), lambda b: (0, 0)),            # b1
            pl.BlockSpec((C, 9 * C), lambda b: (0, 0)),        # w2
            pl.BlockSpec((C, 1), lambda b: (0, 0)),            # b2
        ],
        out_specs=pl.BlockSpec((1, C, HW), lambda b: (b, 0, 0)),
        scratch_shapes=[
            pltpu.VMEM((C, 2 * PAD + HW), jnp.float32),        # zero-padded pixel staging
            pltpu.VMEM((9 * C, HW), jnp.float32),              # im2col (lane-dense)
        ],
        compiler_params=pltpu.CompilerParams(
            dimension_semantics=("parallel",),
            vmem_limit_bytes=vmem_limit),
    )(xi, x, w1r, b1r, w2r, b2r)

    return out_flat.reshape(N, C, H, W)


def _reference(x_nchw, w1, b1, w2, b2):
    """Pure-JAX reference matching the PyTorch forward."""
    dn = ("NCHW", "OIHW", "NCHW")

    def conv(x, w, b):
        y = lax.conv_general_dilated(x, w, window_strides=(1, 1),
                                     padding=((1, 1), (1, 1)),
                                     dimension_numbers=dn)
        return y + b.reshape(1, -1, 1, 1)

    h = jnp.maximum(conv(x_nchw, w1, b1), 0.0)
    h = conv(h, w2, b2)
    return jnp.maximum(x_nchw + h, 0.0)


if __name__ == "__main__":
    key = jax.random.PRNGKey(0)
    N, C, H, W = 2, 4, 16, 16      # in_channels=4, use_bias=True, norm_layer unused
    k_x, k_w1, k_b1, k_w2, k_b2 = jax.random.split(key, 5)

    x = jax.random.normal(k_x, (N, C, H, W), dtype=jnp.float32)

    # PyTorch Conv2d default init: U(-bound, bound), bound = 1/sqrt(fan_in), fan_in = C*3*3
    bound = 1.0 / jnp.sqrt(jnp.float32(C * 3 * 3))
    w1 = jax.random.uniform(k_w1, (C, C, 3, 3), jnp.float32, -bound, bound)
    b1 = jax.random.uniform(k_b1, (C,), jnp.float32, -bound, bound)
    w2 = jax.random.uniform(k_w2, (C, C, 3, 3), jnp.float32, -bound, bound)
    b2 = jax.random.uniform(k_b2, (C,), jnp.float32, -bound, bound)

    out = residual_block(x, w1, b1, w2, b2)
    out = jax.block_until_ready(out)

    ref = _reference(x, w1, b1, w2, b2)
    assert out.shape == (N, C, H, W)
    assert jnp.allclose(out, ref, rtol=1e-4, atol=1e-4), "mismatch vs reference"

    print("KERNEL_OK")
</pallas_src>

<mosaic_0001>
module attributes {stable_mosaic.version = 11 : i64} {
  func.func @_residual_block_kernel(%arg0: i32, %arg1: memref<1x256xi32, #tpu.memory_space<vmem>>, %arg2: memref<1x4x256xf32, #tpu.memory_space<vmem>>, %arg3: memref<4x36xf32, #tpu.memory_space<vmem>>, %arg4: memref<4x1xf32, #tpu.memory_space<vmem>>, %arg5: memref<4x36xf32, #tpu.memory_space<vmem>>, %arg6: memref<4x1xf32, #tpu.memory_space<vmem>>, %arg7: memref<1x4x256xf32, #tpu.memory_space<vmem>>, %arg8: memref<4x512xf32, #tpu.memory_space<vmem>>, %arg9: memref<36x256xf32, #tpu.memory_space<vmem>>) attributes {dimension_semantics = [#tpu.dimension_semantics<parallel>], iteration_bounds = array<i64: 2>, scalar_prefetch = 0 : i64, scratch_operands = 2 : i64, tpu.core_type = #tpu.core_type<tc>, window_params = [{pipeline_mode = #tpu.pipeline_mode<synchronous>, transform_indices = @transform_0, window_bounds = array<i64: 1, 256>}, {transform_indices = @transform_1, window_bounds = array<i64: 1, 4, 256>}, {pipeline_mode = #tpu.pipeline_mode<synchronous>, transform_indices = @transform_2, window_bounds = array<i64: 4, 36>}, {pipeline_mode = #tpu.pipeline_mode<synchronous>, transform_indices = @transform_3, window_bounds = array<i64: 4, 1>}, {pipeline_mode = #tpu.pipeline_mode<synchronous>, transform_indices = @transform_4, window_bounds = array<i64: 4, 36>}, {pipeline_mode = #tpu.pipeline_mode<synchronous>, transform_indices = @transform_5, window_bounds = array<i64: 4, 1>}, {transform_indices = @transform_6, window_bounds = array<i64: 1, 4, 256>}]} {
    %cst = arith.constant 0.000000e+00 : f32
    %0 = vector.broadcast %cst : f32 to vector<4x128xf32>
    %c0 = arith.constant 0 : index
    %c0_0 = arith.constant 0 : index
    %1 = vector.load %arg8[%c0, %c0_0] : memref<4x512xf32, #tpu.memory_space<vmem>>, vector<4x128xf32>
    tpu.vector_store %arg8[%c0, %c0_0], %0 {strides = array<i32>} : memref<4x512xf32, #tpu.memory_space<vmem>>, vector<4x128xf32>,
    %cst_1 = arith.constant 0.000000e+00 : f32
    %2 = vector.broadcast %cst_1 : f32 to vector<4x128xf32>
    %c0_2 = arith.constant 0 : index
    %c384 = arith.constant 384 : index
    %3 = vector.load %arg8[%c0_2, %c384] : memref<4x512xf32, #tpu.memory_space<vmem>>, vector<4x128xf32>
    tpu.vector_store %arg8[%c0_2, %c384], %2 {strides = array<i32>} : memref<4x512xf32, #tpu.memory_space<vmem>>, vector<4x128xf32>,
    %c0_3 = arith.constant 0 : index
    %c0_4 = arith.constant 0 : index
    %c0_5 = arith.constant 0 : index
    %4 = vector.load %arg2[%c0_3, %c0_4, %c0_5] : memref<1x4x256xf32, #tpu.memory_space<vmem>>, vector<1x4x256xf32>
    %5 = vector.shape_cast %4 : vector<1x4x256xf32> to vector<4x256xf32>
    %c0_6 = arith.constant 0 : index
    %c0_7 = arith.constant 0 : index
    %6 = vector.load %arg1[%c0_6, %c0_7] : memref<1x256xi32, #tpu.memory_space<vmem>>, vector<1x256xi32>
    %c0_8 = arith.constant 0 : index
    %c128 = arith.constant 128 : index
    %7 = vector.load %arg8[%c0_8, %c128] : memref<4x512xf32, #tpu.memory_space<vmem>>, vector<4x256xf32>
    tpu.vector_store %arg8[%c0_8, %c128], %5 {strides = array<i32>} : memref<4x512xf32, #tpu.memory_space<vmem>>, vector<4x256xf32>,
    %c0_9 = arith.constant 0 : index
    %c111 = arith.constant 111 : index
    %8 = vector.load %arg8[%c0_9, %c111] : memref<4x512xf32, #tpu.memory_space<vmem>>, vector<4x256xf32>
    %c1_i32 = arith.constant 1 : i32
    %9 = vector.broadcast %c1_i32 : i32 to vector<1x256xi32>
    %10 = arith.cmpi sge, %6, %9 : vector<1x256xi32>
    %cst_10 = arith.constant 0.000000e+00 : f32
    %11 = vector.shape_cast %10 : vector<1x256xi1> to vector<1x256xi1>
    %12 = vector.broadcast %11 : vector<1x256xi1> to vector<4x256xi1>
    %13 = vector.broadcast %cst_10 : f32 to vector<4x256xf32>
    %14 = arith.select %12, %8, %13 : vector<4x256xi1>, vector<4x256xf32>
    %c0_11 = arith.constant 0 : index
    %c0_12 = arith.constant 0 : index
    %15 = vector.load %arg9[%c0_11, %c0_12] : memref<36x256xf32, #tpu.memory_space<vmem>>, vector<4x256xf32>
    tpu.vector_store %arg9[%c0_11, %c0_12], %14 {strides = array<i32>} : memref<36x256xf32, #tpu.memory_space<vmem>>, vector<4x256xf32>,
    %c0_13 = arith.constant 0 : index
    %c112 = arith.constant 112 : index
    %16 = vector.load %arg8[%c0_13, %c112] : memref<4x512xf32, #tpu.memory_space<vmem>>, vector<4x256xf32>
    %c4 = arith.constant 4 : index
    %c0_14 = arith.constant 0 : index
    %17 = vector.load %arg9[%c4, %c0_14] : memref<36x256xf32, #tpu.memory_space<vmem>>, vector<4x256xf32>
    tpu.vector_store %arg9[%c4, %c0_14], %16 {strides = array<i32>} : memref<36x256xf32, #tpu.memory_space<vmem>>, vector<4x256xf32>,
    %c0_15 = arith.constant 0 : index
    %c113 = arith.constant 113 : index
    %18 = vector.load %arg8[%c0_15, %c113] : memref<4x512xf32, #tpu.memory_space<vmem>>, vector<4x256xf32>
    %c14_i32 = arith.constant 14 : i32
    %19 = vector.broadcast %c14_i32 : i32 to vector<1x256xi32>
    %20 = arith.cmpi sle, %6, %19 : vector<1x256xi32>
    %cst_16 = arith.constant 0.000000e+00 : f32
    %21 = vector.shape_cast %20 : vector<1x256xi1> to vector<1x256xi1>
    %22 = vector.broadcast %21 : vector<1x256xi1> to vector<4x256xi1>
    %23 = vector.broadcast %cst_16 : f32 to vector<4x256xf32>
    %24 = arith.select %22, %18, %23 : vector<4x256xi1>, vector<4x256xf32>
    %c8 = arith.constant 8 : index
    %c0_17 = arith.constant 0 : index
    %25 = vector.load %arg9[%c8, %c0_17] : memref<36x256xf32, #tpu.memory_space<vmem>>, vector<4x256xf32>
    tpu.vector_store %arg9[%c8, %c0_17], %24 {strides = array<i32>} : memref<36x256xf32, #tpu.memory_space<vmem>>, vector<4x256xf32>,
    %c0_18 = arith.constant 0 : index
    %c127 = arith.constant 127 : index
    %26 = vector.load %arg8[%c0_18, %c127] : memref<4x512xf32, #tpu.memory_space<vmem>>, vector<4x256xf32>
    %c1_i32_19 = arith.constant 1 : i32
    %27 = vector.broadcast %c1_i32_19 : i32 to vector<1x256xi32>
    %28 = arith.cmpi sge, %6, %27 : vector<1x256xi32>
    %cst_20 = arith.constant 0.000000e+00 : f32
    %29 = vector.shape_cast %28 : vector<1x256xi1> to vector<1x256xi1>
    %30 = vector.broadcast %29 : vector<1x256xi1> to vector<4x256xi1>
    %31 = vector.broadcast %cst_20 : f32 to vector<4x256xf32>
    %32 = arith.select %30, %26, %31 : vector<4x256xi1>, vector<4x256xf32>
    %c12 = arith.constant 12 : index
    %c0_21 = arith.constant 0 : index
    %33 = vector.load %arg9[%c12, %c0_21] : memref<36x256xf32, #tpu.memory_space<vmem>>, vector<4x256xf32>
    tpu.vector_store %arg9[%c12, %c0_21], %32 {strides = array<i32>} : memref<36x256xf32, #tpu.memory_space<vmem>>, vector<4x256xf32>,
    %c0_22 = arith.constant 0 : index
    %c128_23 = arith.constant 128 : index
    %34 = vector.load %arg8[%c0_22, %c128_23] : memref<4x512xf32, #tpu.memory_space<vmem>>, vector<4x256xf32>
    %c16 = arith.constant 16 : index
    %c0_24 = arith.constant 0 : index
    %35 = vector.load %arg9[%c16, %c0_24] : memref<36x256xf32, #tpu.memory_space<vmem>>, vector<4x256xf32>
    tpu.vector_store %arg9[%c16, %c0_24], %34 {strides = array<i32>} : memref<36x256xf32, #tpu.memory_space<vmem>>, vector<4x256xf32>,
    %c0_25 = arith.constant 0 : index
    %c129 = arith.constant 129 : index
    %36 = vector.load %arg8[%c0_25, %c129] : memref<4x512xf32, #tpu.memory_space<vmem>>, vector<4x256xf32>
    %c14_i32_26 = arith.constant 14 : i32
    %37 = vector.broadcast %c14_i32_26 : i32 to vector<1x256xi32>
    %38 = arith.cmpi sle, %6, %37 : vector<1x256xi32>
    %cst_27 = arith.constant 0.000000e+00 : f32
    %39 = vector.shape_cast %38 : vector<1x256xi1> to vector<1x256xi1>
    %40 = vector.broadcast %39 : vector<1x256xi1> to vector<4x256xi1>
    %41 = vector.broadcast %cst_27 : f32 to vector<4x256xf32>
    %42 = arith.select %40, %36, %41 : vector<4x256xi1>, vector<4x256xf32>
    %c20 = arith.constant 20 : index
    %c0_28 = arith.constant 0 : index
    %43 = vector.load %arg9[%c20, %c0_28] : memref<36x256xf32, #tpu.memory_space<vmem>>, vector<4x256xf32>
    tpu.vector_store %arg9[%c20, %c0_28], %42 {strides = array<i32>} : memref<36x256xf32, #tpu.memory_space<vmem>>, vector<4x256xf32>,
    %c0_29 = arith.constant 0 : index
    %c143 = arith.constant 143 : index
    %44 = vector.load %arg8[%c0_29, %c143] : memref<4x512xf32, #tpu.memory_space<vmem>>, vector<4x256xf32>
    %c1_i32_30 = arith.constant 1 : i32
    %45 = vector.broadcast %c1_i32_30 : i32 to vector<1x256xi32>
    %46 = arith.cmpi sge, %6, %45 : vector<1x256xi32>
    %cst_31 = arith.constant 0.000000e+00 : f32
    %47 = vector.shape_cast %46 : vector<1x256xi1> to vector<1x256xi1>
    %48 = vector.broadcast %47 : vector<1x256xi1> to vector<4x256xi1>
    %49 = vector.broadcast %cst_31 : f32 to vector<4x256xf32>
    %50 = arith.select %48, %44, %49 : vector<4x256xi1>, vector<4x256xf32>
    %c24 = arith.constant 24 : index
    %c0_32 = arith.constant 0 : index
    %51 = vector.load %arg9[%c24, %c0_32] : memref<36x256xf32, #tpu.memory_space<vmem>>, vector<4x256xf32>
    tpu.vector_store %arg9[%c24, %c0_32], %50 {strides = array<i32>} : memref<36x256xf32, #tpu.memory_space<vmem>>, vector<4x256xf32>,
    %c0_33 = arith.constant 0 : index
    %c144 = arith.constant 144 : index
    %52 = vector.load %arg8[%c0_33, %c144] : memref<4x512xf32, #tpu.memory_space<vmem>>, vector<4x256xf32>
    %c28 = arith.constant 28 : index
    %c0_34 = arith.constant 0 : index
    %53 = vector.load %arg9[%c28, %c0_34] : memref<36x256xf32, #tpu.memory_space<vmem>>, vector<4x256xf32>
    tpu.vector_store %arg9[%c28, %c0_34], %52 {strides = array<i32>} : memref<36x256xf32, #tpu.memory_space<vmem>>, vector<4x256xf32>,
    %c0_35 = arith.constant 0 : index
    %c145 = arith.constant 145 : index
    %54 = vector.load %arg8[%c0_35, %c145] : memref<4x512xf32, #tpu.memory_space<vmem>>, vector<4x256xf32>
    %c14_i32_36 = arith.constant 14 : i32
    %55 = vector.broadcast %c14_i32_36 : i32 to vector<1x256xi32>
    %56 = arith.cmpi sle, %6, %55 : vector<1x256xi32>
    %cst_37 = arith.constant 0.000000e+00 : f32
    %57 = vector.shape_cast %56 : vector<1x256xi1> to vector<1x256xi1>
    %58 = vector.broadcast %57 : vector<1x256xi1> to vector<4x256xi1>
    %59 = vector.broadcast %cst_37 : f32 to vector<4x256xf32>
    %60 = arith.select %58, %54, %59 : vector<4x256xi1>, vector<4x256xf32>
    %c32 = arith.constant 32 : index
    %c0_38 = arith.constant 0 : index
    %61 = vector.load %arg9[%c32, %c0_38] : memref<36x256xf32, #tpu.memory_space<vmem>>, vector<4x256xf32>
    tpu.vector_store %arg9[%c32, %c0_38], %60 {strides = array<i32>} : memref<36x256xf32, #tpu.memory_space<vmem>>, vector<4x256xf32>,
    %c0_39 = arith.constant 0 : index
    %c0_40 = arith.constant 0 : index
    %62 = vector.load %arg3[%c0_39, %c0_40] : memref<4x36xf32, #tpu.memory_space<vmem>>, vector<4x36xf32>
    %c0_41 = arith.constant 0 : index
    %c0_42 = arith.constant 0 : index
    %63 = vector.load %arg9[%c0_41, %c0_42] : memref<36x256xf32, #tpu.memory_space<vmem>>, vector<36x256xf32>
    %cst_43 = arith.constant dense<0.000000e+00> : vector<4x256xf32>
    %64 = tpu.matmul %62, %63, %cst_43 {dimension_numbers = #tpu.dot_dimension_numbers<[1], [0], [0], [1], [0, 0, 1, 1], [], []>} : vector<4x36xf32>, vector<36x256xf32>, vector<4x256xf32> -> vector<4x256xf32>
    %c0_44 = arith.constant 0 : index
    %c0_45 = arith.constant 0 : index
    %65 = vector.load %arg4[%c0_44, %c0_45] : memref<4x1xf32, #tpu.memory_space<vmem>>, vector<4x1xf32>
    %66 = vector.broadcast %65 : vector<4x1xf32> to vector<4x256xf32>
    %67 = arith.addf %64, %66 : vector<4x256xf32>
    %cst_46 = arith.constant 0.000000e+00 : f32
    %68 = vector.broadcast %cst_46 : f32 to vector<4x256xf32>
    %69 = arith.maximumf %67, %68 : vector<4x256xf32>
    %c0_47 = arith.constant 0 : index
    %c128_48 = arith.constant 128 : index
    %70 = vector.load %arg8[%c0_47, %c128_48] : memref<4x512xf32, #tpu.memory_space<vmem>>, vector<4x256xf32>
    tpu.vector_store %arg8[%c0_47, %c128_48], %69 {strides = array<i32>} : memref<4x512xf32, #tpu.memory_space<vmem>>, vector<4x256xf32>,
    %c0_49 = arith.constant 0 : index
    %c111_50 = arith.constant 111 : index
    %71 = vector.load %arg8[%c0_49, %c111_50] : memref<4x512xf32, #tpu.memory_space<vmem>>, vector<4x256xf32>
    %c1_i32_51 = arith.constant 1 : i32
    %72 = vector.broadcast %c1_i32_51 : i32 to vector<1x256xi32>
    %73 = arith.cmpi sge, %6, %72 : vector<1x256xi32>
    %cst_52 = arith.constant 0.000000e+00 : f32
    %74 = vector.shape_cast %73 : vector<1x256xi1> to vector<1x256xi1>
    %75 = vector.broadcast %74 : vector<1x256xi1> to vector<4x256xi1>
    %76 = vector.broadcast %cst_52 : f32 to vector<4x256xf32>
    %77 = arith.select %75, %71, %76 : vector<4x256xi1>, vector<4x256xf32>
    %c0_53 = arith.constant 0 : index
    %c0_54 = arith.constant 0 : index
    %78 = vector.load %arg9[%c0_53, %c0_54] : memref<36x256xf32, #tpu.memory_space<vmem>>, vector<4x256xf32>
    tpu.vector_store %arg9[%c0_53, %c0_54], %77 {strides = array<i32>} : memref<36x256xf32, #tpu.memory_space<vmem>>, vector<4x256xf32>,
    %c0_55 = arith.constant 0 : index
    %c112_56 = arith.constant 112 : index
    %79 = vector.load %arg8[%c0_55, %c112_56] : memref<4x512xf32, #tpu.memory_space<vmem>>, vector<4x256xf32>
    %c4_57 = arith.constant 4 : index
    %c0_58 = arith.constant 0 : index
    %80 = vector.load %arg9[%c4_57, %c0_58] : memref<36x256xf32, #tpu.memory_space<vmem>>, vector<4x256xf32>
    tpu.vector_store %arg9[%c4_57, %c0_58], %79 {strides = array<i32>} : memref<36x256xf32, #tpu.memory_space<vmem>>, vector<4x256xf32>,
    %c0_59 = arith.constant 0 : index
    %c113_60 = arith.constant 113 : index
    %81 = vector.load %arg8[%c0_59, %c113_60] : memref<4x512xf32, #tpu.memory_space<vmem>>, vector<4x256xf32>
    %c14_i32_61 = arith.constant 14 : i32
    %82 = vector.broadcast %c14_i32_61 : i32 to vector<1x256xi32>
    %83 = arith.cmpi sle, %6, %82 : vector<1x256xi32>
    %cst_62 = arith.constant 0.000000e+00 : f32
    %84 = vector.shape_cast %83 : vector<1x256xi1> to vector<1x256xi1>
    %85 = vector.broadcast %84 : vector<1x256xi1> to vector<4x256xi1>
    %86 = vector.broadcast %cst_62 : f32 to vector<4x256xf32>
    %87 = arith.select %85, %81, %86 : vector<4x256xi1>, vector<4x256xf32>
    %c8_63 = arith.constant 8 : index
    %c0_64 = arith.constant 0 : index
    %88 = vector.load %arg9[%c8_63, %c0_64] : memref<36x256xf32, #tpu.memory_space<vmem>>, vector<4x256xf32>
    tpu.vector_store %arg9[%c8_63, %c0_64], %87 {strides = array<i32>} : memref<36x256xf32, #tpu.memory_space<vmem>>, vector<4x256xf32>,
    %c0_65 = arith.constant 0 : index
    %c127_66 = arith.constant 127 : index
    %89 = vector.load %arg8[%c0_65, %c127_66] : memref<4x512xf32, #tpu.memory_space<vmem>>, vector<4x256xf32>
    %c1_i32_67 = arith.constant 1 : i32
    %90 = vector.broadcast %c1_i32_67 : i32 to vector<1x256xi32>
    %91 = arith.cmpi sge, %6, %90 : vector<1x256xi32>
    %cst_68 = arith.constant 0.000000e+00 : f32
    %92 = vector.shape_cast %91 : vector<1x256xi1> to vector<1x256xi1>
    %93 = vector.broadcast %92 : vector<1x256xi1> to vector<4x256xi1>
    %94 = vector.broadcast %cst_68 : f32 to vector<4x256xf32>
    %95 = arith.select %93, %89, %94 : vector<4x256xi1>, vector<4x256xf32>
    %c12_69 = arith.constant 12 : index
    %c0_70 = arith.constant 0 : index
    %96 = vector.load %arg9[%c12_69, %c0_70] : memref<36x256xf32, #tpu.memory_space<vmem>>, vector<4x256xf32>
    tpu.vector_store %arg9[%c12_69, %c0_70], %95 {strides = array<i32>} : memref<36x256xf32, #tpu.memory_space<vmem>>, vector<4x256xf32>,
    %c0_71 = arith.constant 0 : index
    %c128_72 = arith.constant 128 : index
    %97 = vector.load %arg8[%c0_71, %c128_72] : memref<4x512xf32, #tpu.memory_space<vmem>>, vector<4x256xf32>
    %c16_73 = arith.constant 16 : index
    %c0_74 = arith.constant 0 : index
    %98 = vector.load %arg9[%c16_73, %c0_74] : memref<36x256xf32, #tpu.memory_space<vmem>>, vector<4x256xf32>
    tpu.vector_store %arg9[%c16_73, %c0_74], %97 {strides = array<i32>} : memref<36x256xf32, #tpu.memory_space<vmem>>, vector<4x256xf32>,
    %c0_75 = arith.constant 0 : index
    %c129_76 = arith.constant 129 : index
    %99 = vector.load %arg8[%c0_75, %c129_76] : memref<4x512xf32, #tpu.memory_space<vmem>>, vector<4x256xf32>
    %c14_i32_77 = arith.constant 14 : i32
    %100 = vector.broadcast %c14_i32_77 : i32 to vector<1x256xi32>
    %101 = arith.cmpi sle, %6, %100 : vector<1x256xi32>
    %cst_78 = arith.constant 0.000000e+00 : f32
    %102 = vector.shape_cast %101 : vector<1x256xi1> to vector<1x256xi1>
    %103 = vector.broadcast %102 : vector<1x256xi1> to vector<4x256xi1>
    %104 = vector.broadcast %cst_78 : f32 to vector<4x256xf32>
    %105 = arith.select %103, %99, %104 : vector<4x256xi1>, vector<4x256xf32>
    %c20_79 = arith.constant 20 : index
    %c0_80 = arith.constant 0 : index
    %106 = vector.load %arg9[%c20_79, %c0_80] : memref<36x256xf32, #tpu.memory_space<vmem>>, vector<4x256xf32>
    tpu.vector_store %arg9[%c20_79, %c0_80], %105 {strides = array<i32>} : memref<36x256xf32, #tpu.memory_space<vmem>>, vector<4x256xf32>,
    %c0_81 = arith.constant 0 : index
    %c143_82 = arith.constant 143 : index
    %107 = vector.load %arg8[%c0_81, %c143_82] : memref<4x512xf32, #tpu.memory_space<vmem>>, vector<4x256xf32>
    %c1_i32_83 = arith.constant 1 : i32
    %108 = vector.broadcast %c1_i32_83 : i32 to vector<1x256xi32>
    %109 = arith.cmpi sge, %6, %108 : vector<1x256xi32>
    %cst_84 = arith.constant 0.000000e+00 : f32
    %110 = vector.shape_cast %109 : vector<1x256xi1> to vector<1x256xi1>
    %111 = vector.broadcast %110 : vector<1x256xi1> to vector<4x256xi1>
    %112 = vector.broadcast %cst_84 : f32 to vector<4x256xf32>
    %113 = arith.select %111, %107, %112 : vector<4x256xi1>, vector<4x256xf32>
    %c24_85 = arith.constant 24 : index
    %c0_86 = arith.constant 0 : index
    %114 = vector.load %arg9[%c24_85, %c0_86] : memref<36x256xf32, #tpu.memory_space<vmem>>, vector<4x256xf32>
    tpu.vector_store %arg9[%c24_85, %c0_86], %113 {strides = array<i32>} : memref<36x256xf32, #tpu.memory_space<vmem>>, vector<4x256xf32>,
    %c0_87 = arith.constant 0 : index
    %c144_88 = arith.constant 144 : index
    %115 = vector.load %arg8[%c0_87, %c144_88] : memref<4x512xf32, #tpu.memory_space<vmem>>, vector<4x256xf32>
    %c28_89 = arith.constant 28 : index
    %c0_90 = arith.constant 0 : index
    %116 = vector.load %arg9[%c28_89, %c0_90] : memref<36x256xf32, #tpu.memory_space<vmem>>, vector<4x256xf32>
    tpu.vector_store %arg9[%c28_89, %c0_90], %115 {strides = array<i32>} : memref<36x256xf32, #tpu.memory_space<vmem>>, vector<4x256xf32>,
    %c0_91 = arith.constant 0 : index
    %c145_92 = arith.constant 145 : index
    %117 = vector.load %arg8[%c0_91, %c145_92] : memref<4x512xf32, #tpu.memory_space<vmem>>, vector<4x256xf32>
    %c14_i32_93 = arith.constant 14 : i32
    %118 = vector.broadcast %c14_i32_93 : i32 to vector<1x256xi32>
    %119 = arith.cmpi sle, %6, %118 : vector<1x256xi32>
    %cst_94 = arith.constant 0.000000e+00 : f32
    %120 = vector.shape_cast %119 : vector<1x256xi1> to vector<1x256xi1>
    %121 = vector.broadcast %120 : vector<1x256xi1> to vector<4x256xi1>
    %122 = vector.broadcast %cst_94 : f32 to vector<4x256xf32>
    %123 = arith.select %121, %117, %122 : vector<4x256xi1>, vector<4x256xf32>
    %c32_95 = arith.constant 32 : index
    %c0_96 = arith.constant 0 : index
    %124 = vector.load %arg9[%c32_95, %c0_96] : memref<36x256xf32, #tpu.memory_space<vmem>>, vector<4x256xf32>
    tpu.vector_store %arg9[%c32_95, %c0_96], %123 {strides = array<i32>} : memref<36x256xf32, #tpu.memory_space<vmem>>, vector<4x256xf32>,
    %c0_97 = arith.constant 0 : index
    %c0_98 = arith.constant 0 : index
    %125 = vector.load %arg5[%c0_97, %c0_98] : memref<4x36xf32, #tpu.memory_space<vmem>>, vector<4x36xf32>
    %c0_99 = arith.constant 0 : index
    %c0_100 = arith.constant 0 : index
    %126 = vector.load %arg9[%c0_99, %c0_100] : memref<36x256xf32, #tpu.memory_space<vmem>>, vector<36x256xf32>
    %cst_101 = arith.constant dense<0.000000e+00> : vector<4x256xf32>
    %127 = tpu.matmul %125, %126, %cst_101 {dimension_numbers = #tpu.dot_dimension_numbers<[1], [0], [0], [1], [0, 0, 1, 1], [], []>} : vector<4x36xf32>, vector<36x256xf32>, vector<4x256xf32> -> vector<4x256xf32>
    %c0_102 = arith.constant 0 : index
    %c0_103 = arith.constant 0 : index
    %128 = vector.load %arg6[%c0_102, %c0_103] : memref<4x1xf32, #tpu.memory_space<vmem>>, vector<4x1xf32>
    %129 = vector.broadcast %128 : vector<4x1xf32> to vector<4x256xf32>
    %130 = arith.addf %127, %129 : vector<4x256xf32>
    %131 = arith.addf %5, %130 : vector<4x256xf32>
    %cst_104 = arith.constant 0.000000e+00 : f32
    %132 = vector.broadcast %cst_104 : f32 to vector<4x256xf32>
    %133 = arith.maximumf %131, %132 : vector<4x256xf32>
    %c0_105 = arith.constant 0 : index
    %c0_106 = arith.constant 0 : index
    %c0_107 = arith.constant 0 : index
    %134 = vector.load %arg7[%c0_105, %c0_106, %c0_107] : memref<1x4x256xf32, #tpu.memory_space<vmem>>, vector<1x4x256xf32>
    %135 = vector.shape_cast %134 : vector<1x4x256xf32> to vector<4x256xf32>
    %136 = vector.shape_cast %133 : vector<4x256xf32> to vector<1x4x256xf32>
    tpu.vector_store %arg7[%c0_105, %c0_106, %c0_107], %136 {strides = array<i32>} : memref<1x4x256xf32, #tpu.memory_space<vmem>>, vector<1x4x256xf32>,
    return
  }
  func.func @transform_0(%arg0: i32) -> (i32, i32) {
    %c0_i32 = arith.constant 0 : i32
    %c0_i32_0 = arith.constant 0 : i32
    %c0_i32_1 = arith.constant 0 : i32
    return %c0_i32, %c0_i32_0 : i32, i32
  }
  func.func @transform_1(%arg0: i32) -> (i32, i32, i32) {
    %c0_i32 = arith.constant 0 : i32
    %c0_i32_0 = arith.constant 0 : i32
    %c0_i32_1 = arith.constant 0 : i32
    return %arg0, %c0_i32, %c0_i32_0 : i32, i32, i32
  }
  func.func @transform_2(%arg0: i32) -> (i32, i32) {
    %c0_i32 = arith.constant 0 : i32
    %c0_i32_0 = arith.constant 0 : i32
    %c0_i32_1 = arith.constant 0 : i32
    return %c0_i32, %c0_i32_0 : i32, i32
  }
  func.func @transform_3(%arg0: i32) -> (i32, i32) {
    %c0_i32 = arith.constant 0 : i32
    %c0_i32_0 = arith.constant 0 : i32
    %c0_i32_1 = arith.constant 0 : i32
    return %c0_i32, %c0_i32_0 : i32, i32
  }
  func.func @transform_4(%arg0: i32) -> (i32, i32) {
    %c0_i32 = arith.constant 0 : i32
    %c0_i32_0 = arith.constant 0 : i32
    %c0_i32_1 = arith.constant 0 : i32
    return %c0_i32, %c0_i32_0 : i32, i32
  }
  func.func @transform_5(%arg0: i32) -> (i32, i32) {
    %c0_i32 = arith.constant 0 : i32
    %c0_i32_0 = arith.constant 0 : i32
    %c0_i32_1 = arith.constant 0 : i32
    return %c0_i32, %c0_i32_0 : i32, i32
  }
  func.func @transform_6(%arg0: i32) -> (i32, i32, i32) {
    %c0_i32 = arith.constant 0 : i32
    %c0_i32_0 = arith.constant 0 : i32
    %c0_i32_1 = arith.constant 0 : i32
    return %arg0, %c0_i32, %c0_i32_0 : i32, i32, i32
  }
}

</mosaic_0001>

<llo_original>
// kernel: residual_block.1
$region0: #{residual_block.1}
  #allocation0 [shape = 'u32[]', space=smem, size = 0x4, offset = 0x4, fixed_abs, tag = 'smem constant byte address 0x4 - core index']
  #allocation1 [shape = 'u32[144,128]{1,0:T(1,128)}', space=vmem, size = 0x12000, scoped, tag = 'internal scratch']
  #allocation2 [shape = 'f32[4,512]{1,0:T(4,128)}', space=vmem, size = 0x2000, scoped, tag = 'scratch operand']
  #allocation3 [shape = 'f32[36,256]{1,0:T(8,128)}', space=vmem, size = 0xa000, scoped, tag = 'scratch operand']
  %s0 = inlined_call_operand.vmem [shape: s32[1,256], index: 0, kind: input, shape index: {}]
  %s1 = inlined_call_operand.vmem [shape: f32[2,4,256], index: 1, kind: input, shape index: {}]
  %s2 = inlined_call_operand.vmem [shape: f32[4,36], index: 2, kind: input, shape index: {}]
  %s3 = inlined_call_operand.vmem [shape: f32[4,1], index: 3, kind: input, shape index: {}]
  %s4 = inlined_call_operand.vmem [shape: f32[4,36], index: 4, kind: input, shape index: {}]
  %s5 = inlined_call_operand.vmem [shape: f32[4,1], index: 5, kind: input, shape index: {}]
  %s6 = inlined_call_operand.vmem [shape: f32[2,4,256], index: 6, kind: output, shape index: {}]
  %s7 = sld [smem:[#allocation0]]
  $region57: #{residual_block.1} parent=0
    _
  %s9 = ssub.s32 1, %s7
  %s10 = scalar_select 0, %s9, %s7
  loop: start=0, step=1, limit=4
  $region2: #{residual_block.1} parent=0 // loop_pre_header
    _
  $region3: #{residual_block.1} parent=0 // loop_header
    %s12 = sphi 0, %s16
    %p13 = scmp.ge.s32.totalorder %s12, 4
    %s20 = sphi 0, %s20
    %s22 = sphi 0, %s20
    %s23 = sphi 0, %s22
    %s37 = sphi 0, %s23
    %s43 = sphi 0, %s45
    %s46 = sphi 0, %s43
    %s47 = sphi 0, %s46
    %s63 = sphi 0, %s47
    %s67 = sphi 0, %s67
    %s69 = sphi 0, %s67
    %s70 = sphi 0, %s69
    %s84 = sphi 0, %s70
    %s88 = sphi 0, %s88
    %s90 = sphi 0, %s88
    %s91 = sphi 0, %s90
    %s105 = sphi 0, %s91
    %s109 = sphi 0, %s109
    %s111 = sphi 0, %s109
    %s112 = sphi 0, %s111
    %s126 = sphi 0, %s112
    %s130 = sphi 0, %s130
    %s132 = sphi 0, %s130
    %s133 = sphi 0, %s132
    %s147 = sphi 0, %s133
    %s153 = sphi 0, %s155
    %s156 = sphi 0, %s153
    %s157 = sphi 0, %s156
    %s173 = sphi 0, %s157
  $region4: #{residual_block.1} parent=0 // loop_header_branch
    %15 = sbr.rel (%p13) target = $region8
  $region5: #{residual_block.1} parent=0 // loop_body
    %s17 = ssub.s32 %s12, 1
    %s18 = ssub.s32 %s12, 2
    %s19 = sadd.s32 %s12, 1
    %s21 = sadd.s32 %s20, 1
    %p24 = scmp.eq.s32.totalorder %s12, 1
    %p25 = scmp.ne.s32.totalorder %s20, %s22
    %p26 = scmp.eq.s32.totalorder %s12, 0
    %p27 = por %p25, %p26
    %p28 = scmp.ne.s32.totalorder %s20, %s22
    %p29 = scmp.eq.s32.totalorder %s17, 1
    %p30 = por %p28, %p29
    %p31 = scmp.ne.s32.totalorder %s22, %s23
    %p32 = scmp.eq.s32.totalorder %s17, 0
    %p33 = por %p31, %p32
    %p34 = scmp.ne.s32.totalorder %s22, %s23
    %p35 = scmp.eq.s32.totalorder %s18, 1
    %p36 = por %p34, %p35
    %p38 = scmp.ne.s32.totalorder %s23, %s37
    %p39 = scmp.eq.s32.totalorder %s18, 0
    %p40 = por %p38, %p39
    %s41 = ssub.s32 %s12, %s19
    %p42 = scmp.eq.s32.totalorder %s41, 0
    %s44 = sadd.s32 %s43, 1
    %s45 = scalar_select %p42, %s43, %s44
    %p48 = pneg %p42
    %p49 = scmp.eq.s32.totalorder %s12, 1
    %p50 = por %p48, %p49
    %p51 = scmp.ne.s32.totalorder %s43, %s46
    %p52 = scmp.eq.s32.totalorder %s12, 0
    %p53 = por %p51, %p52
    %p54 = scmp.ne.s32.totalorder %s43, %s46
    %p55 = scmp.eq.s32.totalorder %s17, 1
    %p56 = por %p54, %p55
    %p57 = scmp.ne.s32.totalorder %s46, %s47
    %p58 = scmp.eq.s32.totalorder %s17, 0
    %p59 = por %p57, %p58
    %p60 = scmp.ne.s32.totalorder %s46, %s47
    %p61 = scmp.eq.s32.totalorder %s18, 1
    %p62 = por %p60, %p61
    %p64 = scmp.ne.s32.totalorder %s47, %s63
    %p65 = scmp.eq.s32.totalorder %s18, 0
    %p66 = por %p64, %p65
    %s68 = sadd.s32 %s67, 1
    %p71 = scmp.eq.s32.totalorder %s12, 1
    %p72 = scmp.ne.s32.totalorder %s67, %s69
    %p73 = scmp.eq.s32.totalorder %s12, 0
    %p74 = por %p72, %p73
    %p75 = scmp.ne.s32.totalorder %s67, %s69
    %p76 = scmp.eq.s32.totalorder %s17, 1
    %p77 = por %p75, %p76
    %p78 = scmp.ne.s32.totalorder %s69, %s70
    %p79 = scmp.eq.s32.totalorder %s17, 0
    %p80 = por %p78, %p79
    %p81 = scmp.ne.s32.totalorder %s69, %s70
    %p82 = scmp.eq.s32.totalorder %s18, 1
    %p83 = por %p81, %p82
    %p85 = scmp.ne.s32.totalorder %s70, %s84
    %p86 = scmp.eq.s32.totalorder %s18, 0
    %p87 = por %p85, %p86
    %s89 = sadd.s32 %s88, 1
    %p92 = scmp.eq.s32.totalorder %s12, 1
    %p93 = scmp.ne.s32.totalorder %s88, %s90
    %p94 = scmp.eq.s32.totalorder %s12, 0
    %p95 = por %p93, %p94
    %p96 = scmp.ne.s32.totalorder %s88, %s90
    %p97 = scmp.eq.s32.totalorder %s17, 1
    %p98 = por %p96, %p97
    %p99 = scmp.ne.s32.totalorder %s90, %s91
    %p100 = scmp.eq.s32.totalorder %s17, 0
    %p101 = por %p99, %p100
    %p102 = scmp.ne.s32.totalorder %s90, %s91
    %p103 = scmp.eq.s32.totalorder %s18, 1
    %p104 = por %p102, %p103
    %p106 = scmp.ne.s32.totalorder %s91, %s105
    %p107 = scmp.eq.s32.totalorder %s18, 0
    %p108 = por %p106, %p107
    %s110 = sadd.s32 %s109, 1
    %p113 = scmp.eq.s32.totalorder %s12, 1
    %p114 = scmp.ne.s32.totalorder %s109, %s111
    %p115 = scmp.eq.s32.totalorder %s12, 0
    %p116 = por %p114, %p115
    %p117 = scmp.ne.s32.totalorder %s109, %s111
    %p118 = scmp.eq.s32.totalorder %s17, 1
    %p119 = por %p117, %p118
    %p120 = scmp.ne.s32.totalorder %s111, %s112
    %p121 = scmp.eq.s32.totalorder %s17, 0
    %p122 = por %p120, %p121
    %p123 = scmp.ne.s32.totalorder %s111, %s112
    %p124 = scmp.eq.s32.totalorder %s18, 1
    %p125 = por %p123, %p124
    %p127 = scmp.ne.s32.totalorder %s112, %s126
    %p128 = scmp.eq.s32.totalorder %s18, 0
    %p129 = por %p127, %p128
    %s131 = sadd.s32 %s130, 1
    %p134 = scmp.eq.s32.totalorder %s12, 1
    %p135 = scmp.ne.s32.totalorder %s130, %s132
    %p136 = scmp.eq.s32.totalorder %s12, 0
    %p137 = por %p135, %p136
    %p138 = scmp.ne.s32.totalorder %s130, %s132
    %p139 = scmp.eq.s32.totalorder %s17, 1
    %p140 = por %p138, %p139
    %p141 = scmp.ne.s32.totalorder %s132, %s133
    %p142 = scmp.eq.s32.totalorder %s17, 0
    %p143 = por %p141, %p142
    %p144 = scmp.ne.s32.totalorder %s132, %s133
    %p145 = scmp.eq.s32.totalorder %s18, 1
    %p146 = por %p144, %p145
    %p148 = scmp.ne.s32.totalorder %s133, %s147
    %p149 = scmp.eq.s32.totalorder %s18, 0
    %p150 = por %p148, %p149
    %s151 = ssub.s32 %s12, %s19
    %p152 = scmp.eq.s32.totalorder %s151, 0
    %s154 = sadd.s32 %s153, 1
    %s155 = scalar_select %p152, %s153, %s154
    %p158 = pneg %p152
    %p159 = scmp.eq.s32.totalorder %s12, 1
    %p160 = por %p158, %p159
    %p161 = scmp.ne.s32.totalorder %s153, %s156
    %p162 = scmp.eq.s32.totalorder %s12, 0
    %p163 = por %p161, %p162
    %p164 = scmp.ne.s32.totalorder %s153, %s156
    %p165 = scmp.eq.s32.totalorder %s17, 1
    %p166 = por %p164, %p165
    %p167 = scmp.ne.s32.totalorder %s156, %s157
    %p168 = scmp.eq.s32.totalorder %s17, 0
    %p169 = por %p167, %p168
    %p170 = scmp.ne.s32.totalorder %s156, %s157
    %p171 = scmp.eq.s32.totalorder %s18, 1
    %p172 = por %p170, %p171
    %p174 = scmp.ne.s32.totalorder %s157, %s173
    %p175 = scmp.eq.s32.totalorder %s18, 0
    %p176 = por %p174, %p175
    %p177 = scmp.le.s32.totalorder 1, %s12
    %p178 = scmp.lt.s32.totalorder %s12, 3
    %p179 = pnand %p177, %p178
    %p180 = pneg %p179
    // Predicated region
    $region9: #{residual_block.1} parent=5 // pred_check
      _
    $region10: #{residual_block.1} parent=5 // pred_check_branch
      %182 = sbr.rel (%p179) target = $region12
    $region11: #{residual_block.1} parent=5 // pred_region
      %s183 = ssub.s32 %s12, 1
      // Predicated region
      $region13: #{residual_block.1} parent=11 // pred_check
        %p184 = pneg %p33
      $region14: #{residual_block.1} parent=11 // pred_check_branch
        %186 = sbr.rel (%p184) target = $region16
      $region15: #{residual_block.1} parent=11 // pred_region
        _
      $region16: #{residual_block.1} parent=11 // pred_fallthru
        _
      // Predicated region
      $region17: #{residual_block.1} parent=11 // pred_check
        %p187 = pneg %p80
      $region18: #{residual_block.1} parent=11 // pred_check_branch
        %189 = sbr.rel (%p187) target = $region20
      $region19: #{residual_block.1} parent=11 // pred_region
        _
      $region20: #{residual_block.1} parent=11 // pred_fallthru
        _
      // Predicated region
      $region21: #{residual_block.1} parent=11 // pred_check
        %p190 = pneg %p101
      $region22: #{residual_block.1} parent=11 // pred_check_branch
        %192 = sbr.rel (%p190) target = $region24
      $region23: #{residual_block.1} parent=11 // pred_region
        _
      $region24: #{residual_block.1} parent=11 // pred_fallthru
        _
      // Predicated region
      $region25: #{residual_block.1} parent=11 // pred_check
        %p193 = pneg %p122
      $region26: #{residual_block.1} parent=11 // pred_check_branch
        %195 = sbr.rel (%p193) target = $region28
      $region27: #{residual_block.1} parent=11 // pred_region
        _
      $region28: #{residual_block.1} parent=11 // pred_fallthru
        _
      // Predicated region
      $region29: #{residual_block.1} parent=11 // pred_check
        %p196 = pneg %p143
      $region30: #{residual_block.1} parent=11 // pred_check_branch
        %198 = sbr.rel (%p196) target = $region32
      $region31: #{residual_block.1} parent=11 // pred_region
        _
      $region32: #{residual_block.1} parent=11 // pred_fallthru
        _
    $region12: #{residual_block.1} parent=5 // pred_fallthru
      _
    %p199 = scmp.lt.s32.totalorder %s12, 2
    // Predicated region
    $region33: #{residual_block.1} parent=5 // pred_check
      %p200 = pneg %p199
    $region34: #{residual_block.1} parent=5 // pred_check_branch
      %202 = sbr.rel (%p200) target = $region36
    $region35: #{residual_block.1} parent=5 // pred_region
      // Predicated region
      $region37: #{residual_block.1} parent=35 // pred_check
        %p203 = pneg %p53
      $region38: #{residual_block.1} parent=35 // pred_check_branch
        %205 = sbr.rel (%p203) target = $region40
      $region39: #{residual_block.1} parent=35 // pred_region
        %p206 = scmp.lt.s32.totalorder %s12, 1
        %s207 = scalar_select %p206, %s12, 1
        %s208 = smul.addr %s207, 2
        %s209 = smul.addr %s208, 4
        %s210 = scalar_lea.vmem %s1, %s209
      $region40: #{residual_block.1} parent=35 // pred_fallthru
        _
    $region36: #{residual_block.1} parent=5 // pred_fallthru
      _
    %p211 = scmp.le.s32.totalorder 1, %s12
    %p212 = scmp.lt.s32.totalorder %s12, 3
    %p213 = pnand %p211, %p212
    %p214 = pneg %p213
    // Predicated region
    $region41: #{residual_block.1} parent=5 // pred_check
      _
    $region42: #{residual_block.1} parent=5 // pred_check_branch
      %216 = sbr.rel (%p213) target = $region44
    $region43: #{residual_block.1} parent=5 // pred_region
      %s217 = ssub.s32 %s12, 1
      %p218 = pneg %p33
      %p219 = pneg %p30
      %p220 = scmp.lt.s32.totalorder %s17, 1
      %s221 = scalar_select %p220, %s17, 1
      %s222 = smul.addr %s221, 2
      %s223 = smul.addr %s222, 4
      %s224 = scalar_lea.vmem %s1, %s223
      %p225 = pneg %p59
      %p226 = pneg %p56
      %p227 = pneg %p80
      %p228 = pneg %p77
      %p229 = pneg %p101
      %p230 = pneg %p98
      %p231 = pneg %p122
      %p232 = pneg %p119
      %p233 = pneg %p143
      %p234 = pneg %p140
      %p235 = pneg %p169
      %p236 = pneg %p166
      %p237 = scmp.lt.s32.totalorder %s17, 1
      %s238 = scalar_select %p237, %s17, 1
      %s239 = smul.addr %s238, 2
      %s240 = smul.addr %s239, 4
      %s241 = scalar_lea.vmem %s6, %s240
      %p242 = scmp.lt.s32.totalorder %s17, 1
      %s243 = scalar_select %p242, %s17, 1
      %s244 = smul.addr %s243, 2
      %s245 = smul.addr %s244, 4
      %s246 = scalar_lea.vmem %s1, %s245
      %p247 = scmp.lt.s32.totalorder %s17, 1
      %s248 = scalar_select %p247, %s17, 1
      %s249 = smul.addr %s248, 2
      %s250 = smul.addr %s249, 4
      %s251 = scalar_lea.vmem %s6, %s250
      %252 = vst [vmem:[#allocation2] sm:$0xf] 0.0
      %253 = vst [vmem:[#allocation2 + $0xc] sm:$0xf] 0.0
      %v254 = vld [vmem:[%s246] sm:$0xff]
      %v255 = vld [vmem:[%s0] sm:$0x3]
      %256 = vst [vmem:[#allocation2 + $0x4] sm:$0xff] %v254
      %v257 = vld [vmem:[#allocation2] sm:$0xff]
      %v258 = vld [vmem:[#allocation2 + $0x8] sm:$0xf]
      %vm259 = vcmp.ge.s32.totalorder %v255, 1
      %v260 = vsel %vm259, 1, 0
      %v261 = vlaneseq
      %v262 = vshrl.u32 %v261, 7
      %v263 = vsub.s32 0, %v262
      %v264 = vrot.slane %v260, %v263
      %v265 = vlaneseq
      %v266 = vshrl.u32 %v265, 7
      %v267 = vsub.s32 1, %v266
      %v268 = vrot.slane %v260, %v267
      %vm269 = vcmp.eq.s32.totalorder %v264, 1
      %vm270 = vcmp.eq.s32.totalorder %v268, 1
      %v273 = vcombine.high %v257, %v257
      %274 = vrot.lane.b32.xlu0 %v257, 17
      %v275 = vpop.permute.xlu0 %274
      %276 = vrot.lane.b32.xlu0 %v273, 17
      %v277 = vpop.permute.xlu0 %276
      %278 = vrot.lane.b32.xlu0 %v258, 17
      %v279 = vpop.permute.xlu0 %278
      %vm280 = vcmask 138240
      %v281 = vsel %vm280, %v275, %v277
      %v282 = vsel %vm280, %v277, %v279
      %v285 = vsel %vm269, %v281, 0.0
      %v286 = vsel %vm270, %v282, 0.0
      %287 = vst [vmem:[#allocation3] sm:$0xf] %v285
      %288 = vst [vmem:[#allocation3 + $0x8] sm:$0xf] %v286
      %v289 = vld [vmem:[#allocation2] sm:$0xff]
      %v290 = vld [vmem:[#allocation2 + $0x8] sm:$0xf]
      %v293 = vcombine.low %v289, %v289
      %v294 = vcombine.low %v290, %v290
      %295 = vrot.lane.b32.xlu0 %v293, 16
      %v296 = vpop.permute.xlu0 %295
      %297 = vrot.lane.b32.xlu0 %v289, 16
      %v298 = vpop.permute.xlu0 %297
      %299 = vrot.lane.b32.xlu0 %v294, 16
      %v300 = vpop.permute.xlu0 %299
      %vm301 = vcmask 130048
      %v302 = vsel %vm301, %v296, %v298
      %v303 = vsel %vm301, %v298, %v300
      %306 = vst [vmem:[#allocation3] sm:$0xf0] %v302
      %307 = vst [vmem:[#allocation3 + $0x8] sm:$0xf0] %v303
      %v308 = vld [vmem:[#allocation2] sm:$0xff]
      %v309 = vld [vmem:[#allocation2 + $0x8] sm:$0xf]
      %vm310 = vcmp.le.s32.totalorder %v255, 14
      %v311 = vsel %vm310, 1, 0
      %v312 = vlaneseq
      %v313 = vshrl.u32 %v312, 7
      %v314 = vsub.s32 0, %v313
      %v315 = vrot.slane %v311, %v314
      %v316 = vlaneseq
      %v317 = vshrl.u32 %v316, 7
      %v318 = vsub.s32 1, %v317
      %v319 = vrot.slane %v311, %v318
      %vm320 = vcmp.eq.s32.totalorder %v315, 1
      %vm321 = vcmp.eq.s32.totalorder %v319, 1
      %v324 = vcombine.high %v308, %v308
      %325 = vrot.lane.b32.xlu0 %v308, 15
      %v326 = vpop.permute.xlu0 %325
      %327 = vrot.lane.b32.xlu0 %v324, 15
      %v328 = vpop.permute.xlu0 %327
      %329 = vrot.lane.b32.xlu0 %v309, 15
      %v330 = vpop.permute.xlu0 %329
      %vm331 = vcmask 121856
      %v332 = vsel %vm331, %v326, %v328
      %v333 = vsel %vm331, %v328, %v330
      %v336 = vsel %vm320, %v332, 0.0
      %v337 = vsel %vm321, %v333, 0.0
      %338 = vst [vmem:[#allocation3 + $0x10] sm:$0xf] %v336
      %339 = vst [vmem:[#allocation3 + $0x18] sm:$0xf] %v337
      %v340 = vld [vmem:[#allocation2] sm:$0xff]
      %v341 = vld [vmem:[#allocation2 + $0x8] sm:$0xf]
      %v344 = vcombine.high %v340, %v340
      %345 = vrot.lane.b32.xlu0 %v340, 1
      %v346 = vpop.permute.xlu0 %345
      %347 = vrot.lane.b32.xlu0 %v344, 1
      %v348 = vpop.permute.xlu0 %347
      %349 = vrot.lane.b32.xlu0 %v341, 1
      %v350 = vpop.permute.xlu0 %349
      %vm351 = vcmask 7168
      %v352 = vsel %vm351, %v346, %v348
      %v353 = vsel %vm351, %v348, %v350
      %v356 = vsel %vm269, %v352, 0.0
      %v357 = vsel %vm270, %v353, 0.0
      %v360 = vrot.slane %v356, 4
      %v361 = vrot.slane %v357, 4
      %364 = vst [vmem:[#allocation3 + $0x10] sm:$0xf0] %v360
      %365 = vst [vmem:[#allocation3 + $0x18] sm:$0xf0] %v361
      %v366 = vld [vmem:[#allocation2 + $0x4] sm:$0xff]
      %v368 = vcombine.high %v366, %v366
      %370 = vst [vmem:[#allocation3 + $0x20] sm:$0xf] %v366
      %371 = vst [vmem:[#allocation3 + $0x28] sm:$0xf] %v368
      %v372 = vld [vmem:[#allocation2 + $0x4] sm:$0xff]
      %v373 = vld [vmem:[#allocation2 + $0xc] sm:$0xf]
      %v376 = vcombine.high %v372, %v372
      %377 = vrot.lane.b32.xlu0 %v372, 127
      %v378 = vpop.permute.xlu0 %377
      %379 = vrot.lane.b32.xlu0 %v376, 127
      %v380 = vpop.permute.xlu0 %379
      %381 = vrot.lane.b32.xlu0 %v373, 127
      %v382 = vpop.permute.xlu0 %381
      %vm383 = vcmask 1039360
      %v384 = vsel %vm383, %v378, %v380
      %v385 = vsel %vm383, %v380, %v382
      %v388 = vsel %vm320, %v384, 0.0
      %v389 = vsel %vm321, %v385, 0.0
      %v392 = vrot.slane %v388, 4
      %v393 = vrot.slane %v389, 4
      %396 = vst [vmem:[#allocation3 + $0x20] sm:$0xf0] %v392
      %397 = vst [vmem:[#allocation3 + $0x28] sm:$0xf0] %v393
      %v398 = vld [vmem:[#allocation2 + $0x4] sm:$0xff]
      %v399 = vld [vmem:[#allocation2 + $0xc] sm:$0xf]
      %v402 = vcombine.high %v398, %v398
      %403 = vrot.lane.b32.xlu0 %v398, 113
      %v404 = vpop.permute.xlu0 %403
      %405 = vrot.lane.b32.xlu0 %v402, 113
      %v406 = vpop.permute.xlu0 %405
      %407 = vrot.lane.b32.xlu0 %v399, 113
      %v408 = vpop.permute.xlu0 %407
      %vm409 = vcmask 924672
      %v410 = vsel %vm409, %v404, %v406
      %v411 = vsel %vm409, %v406, %v408
      %v414 = vsel %vm269, %v410, 0.0
      %v415 = vsel %vm270, %v411, 0.0
      %416 = vst [vmem:[#allocation3 + $0x30] sm:$0xf] %v414
      %417 = vst [vmem:[#allocation3 + $0x38] sm:$0xf] %v415
      %v418 = vld [vmem:[#allocation2 + $0x4] sm:$0xff]
      %v419 = vld [vmem:[#allocation2 + $0xc] sm:$0xf]
      %v422 = vcombine.low %v418, %v418
      %v423 = vcombine.low %v419, %v419
      %424 = vrot.lane.b32.xlu0 %v422, 112
      %v425 = vpop.permute.xlu0 %424
      %426 = vrot.lane.b32.xlu0 %v418, 112
      %v427 = vpop.permute.xlu0 %426
      %428 = vrot.lane.b32.xlu0 %v423, 112
      %v429 = vpop.permute.xlu0 %428
      %vm430 = vcmask 916480
      %v431 = vsel %vm430, %v425, %v427
      %v432 = vsel %vm430, %v427, %v429
      %435 = vst [vmem:[#allocation3 + $0x30] sm:$0xf0] %v431
      %436 = vst [vmem:[#allocation3 + $0x38] sm:$0xf0] %v432
      %v437 = vld [vmem:[#allocation2 + $0x4] sm:$0xff]
      %v438 = vld [vmem:[#allocation2 + $0xc] sm:$0xf]
      %v441 = vcombine.high %v437, %v437
      %442 = vrot.lane.b32.xlu0 %v437, 111
      %v443 = vpop.permute.xlu0 %442
      %444 = vrot.lane.b32.xlu0 %v441, 111
      %v445 = vpop.permute.xlu0 %444
      %446 = vrot.lane.b32.xlu0 %v438, 111
      %v447 = vpop.permute.xlu0 %446
      %vm448 = vcmask 908288
      %v449 = vsel %vm448, %v443, %v445
      %v450 = vsel %vm448, %v445, %v447
      %v453 = vsel %vm320, %v449, 0.0
      %v454 = vsel %vm321, %v450, 0.0
      %455 = vst [vmem:[#allocation3 + $0x40] sm:$0xf] %v453
      %456 = vst [vmem:[#allocation3 + $0x48] sm:$0xf] %v454
      %v457 = vld [vmem:[%s2] sm:$0xf]
      %v458 = vld [vmem:[#allocation3] sm:$0xff]
      %v459 = vld [vmem:[#allocation3 + $0x8] sm:$0xff]
      %v460 = vld [vmem:[#allocation3 + $0x10] sm:$0xff]
      %v461 = vld [vmem:[#allocation3 + $0x18] sm:$0xff]
      %v462 = vld [vmem:[#allocation3 + $0x20] sm:$0xff]
      %v463 = vld [vmem:[#allocation3 + $0x28] sm:$0xff]
      %v464 = vld [vmem:[#allocation3 + $0x30] sm:$0xff]
      %v465 = vld [vmem:[#allocation3 + $0x38] sm:$0xff]
      %v466 = vld [vmem:[#allocation3 + $0x40] sm:$0xf]
      %v467 = vld [vmem:[#allocation3 + $0x48] sm:$0xf]
      %v468 = vld [vmem:[%s3] sm:$0xf]
      %470 = vset.pattern.permute.xlu0 0
      %471 = vperm.xlu0 %470, %v468
      %v472 = vpop.permute.xlu0 %471
      %vm474 = vcmask 293888
      %v476 = vsel %vm474, %v457, 0
      %vm478 = vcmask 1043456
      %v480 = vsel %vm478, %v466, 0
      %v483 = vsel %vm478, %v467, 0
      %485 = vmatprep.subr.mxu0 0.0
      %486 = vmatpush1.msra.mxu0 0.0
      %487 = vmatprep.subr.mxu0 0.0
      %488 = vmatpush1.msra.mxu0 0.0
      %489 = vmatprep.subr.mxu0 0.0
      %490 = vmatpush1.msra.mxu0 0.0
      %491 = vmatprep.subr.mxu0 0.0
      %492 = vmatpush1.msra.mxu0 0.0
      %493 = vmatprep.subr.mxu0 0.0
      %494 = vmatpush1.msra.mxu0 0.0
      %495 = vmatprep.subr.mxu0 0.0
      %496 = vmatpush1.msra.mxu0 0.0
      %497 = vmatprep.subr.mxu0 0.0
      %498 = vmatpush1.msra.mxu0 0.0
      %499 = vmatprep.subr.mxu0 0.0
      %500 = vmatpush1.msra.mxu0 0.0
      %501 = vmatprep.subr.mxu0 0.0
      %502 = vmatpush1.msra.mxu0 0.0
      %503 = vmatprep.subr.mxu0 0.0
      %504 = vmatpush1.msra.mxu0 0.0
      %505 = vmatprep.subr.mxu0 0.0
      %506 = vmatpush1.msra.mxu0 0.0
      %507 = vmatprep.subr.mxu0 %v483
      %508 = vmatpush1.msra.mxu0 %v480
      %509 = vmatprep.subr.mxu0 %v465
      %510 = vmatpush1.msra.mxu0 %v464
      %511 = vmatprep.subr.mxu0 %v463
      %512 = vmatpush1.msra.mxu0 %v462
      %513 = vmatprep.subr.mxu0 %v461
      %514 = vmatpush1.msra.mxu0 %v460
      %515 = vmatprep.subr.mxu0 %v459
      %516 = vmatpush1.msra.mxu0 %v458
      %517 = vmatprep.subr.mxu0 0.0
      %518 = vmatpush2.msra.mxu0 0.0
      %519 = vmatprep.subr.mxu0 0.0
      %520 = vmatpush2.msra.mxu0 0.0
      %521 = vmatprep.subr.mxu0 0.0
      %522 = vmatpush2.msra.mxu0 0.0
      %523 = vmatprep.subr.mxu0 0.0
      %524 = vmatpush2.msra.mxu0 0.0
      %525 = vmatprep.subr.mxu0 0.0
      %526 = vmatpush2.msra.mxu0 0.0
      %527 = vmatprep.subr.mxu0 0.0
      %528 = vmatpush2.msra.mxu0 0.0
      %529 = vmatprep.subr.mxu0 0.0
      %530 = vmatpush2.msra.mxu0 0.0
      %531 = vmatprep.subr.mxu0 0.0
      %532 = vmatpush2.msra.mxu0 0.0
      %533 = vmatprep.subr.mxu0 0.0
      %534 = vmatpush2.msra.mxu0 0.0
      %535 = vmatprep.subr.mxu0 0.0
      %536 = vmatpush2.msra.mxu0 0.0
      %537 = vmatprep.subr.mxu0 0.0
      %538 = vmatpush2.msra.mxu0 0.0
      %539 = vmatprep.subr.mxu0 0.0
      %540 = vmatpush2.msra.mxu0 0.0
      %541 = vmatprep.subr.mxu0 0.0
      %542 = vmatpush2.msra.mxu0 0.0
      %543 = vmatprep.subr.mxu0 0.0
      %544 = vmatpush2.msra.mxu0 0.0
      %545 = vmatprep.subr.mxu0 0.0
      %546 = vmatpush2.msra.mxu0 0.0
      %547 = vmatprep.subr.mxu0 0.0
      %548 = vmatpush2.msra.mxu0 0.0
      %549 = vmatprep.mubr.f32.mxu0 0.0
      %550 = vmatmul.mubr.f32.gmra.mxu0 %v476
      %v551 = vpop.f32.mrf.mxu0
      %v552 = vadd.f32 %v472, %v551
      %v553 = vpop.f32.mrf.mxu0
      %v554 = vadd.f32 %v472, %v553
      %555 = vdwg.mxu0
      %v556 = vmax.f32 %v552, 0.0
      %v557 = vmax.f32 %v554, 0.0
      %v560 = vcombine.low %v556, %v557
      %562 = vst [vmem:[#allocation2 + $0x4] sm:$0xff] %v560
      %v563 = vld [vmem:[#allocation2] sm:$0xff]
      %v564 = vld [vmem:[#allocation2 + $0x8] sm:$0xf]
      %v567 = vcombine.high %v563, %v563
      %568 = vrot.lane.b32.xlu0 %v563, 17
      %v569 = vpop.permute.xlu0 %568
      %570 = vrot.lane.b32.xlu0 %v567, 17
      %v571 = vpop.permute.xlu0 %570
      %572 = vrot.lane.b32.xlu0 %v564, 17
      %v573 = vpop.permute.xlu0 %572
      %v574 = vsel %vm280, %v569, %v571
      %v575 = vsel %vm280, %v571, %v573
      %v578 = vsel %vm269, %v574, 0.0
      %v579 = vsel %vm270, %v575, 0.0
      %580 = vst [vmem:[#allocation3] sm:$0xf] %v578
      %581 = vst [vmem:[#allocation3 + $0x8] sm:$0xf] %v579
      %v582 = vld [vmem:[#allocation2] sm:$0xff]
      %v583 = vld [vmem:[#allocation2 + $0x8] sm:$0xf]
      %v586 = vcombine.low %v582, %v582
      %v587 = vcombine.low %v583, %v583
      %588 = vrot.lane.b32.xlu0 %v586, 16
      %v589 = vpop.permute.xlu0 %588
      %590 = vrot.lane.b32.xlu0 %v582, 16
      %v591 = vpop.permute.xlu0 %590
      %592 = vrot.lane.b32.xlu0 %v587, 16
      %v593 = vpop.permute.xlu0 %592
      %v594 = vsel %vm301, %v589, %v591
      %v595 = vsel %vm301, %v591, %v593
      %598 = vst [vmem:[#allocation3] sm:$0xf0] %v594
      %599 = vst [vmem:[#allocation3 + $0x8] sm:$0xf0] %v595
      %v600 = vld [vmem:[#allocation2] sm:$0xff]
      %v601 = vld [vmem:[#allocation2 + $0x8] sm:$0xf]
      %v604 = vcombine.high %v600, %v600
      %605 = vrot.lane.b32.xlu0 %v600, 15
      %v606 = vpop.permute.xlu0 %605
      %607 = vrot.lane.b32.xlu0 %v604, 15
      %v608 = vpop.permute.xlu0 %607
      %609 = vrot.lane.b32.xlu0 %v601, 15
      %v610 = vpop.permute.xlu0 %609
      %v611 = vsel %vm331, %v606, %v608
      %v612 = vsel %vm331, %v608, %v610
      %v615 = vsel %vm320, %v611, 0.0
      %v616 = vsel %vm321, %v612, 0.0
      %617 = vst [vmem:[#allocation3 + $0x10] sm:$0xf] %v615
      %618 = vst [vmem:[#allocation3 + $0x18] sm:$0xf] %v616
      %v619 = vld [vmem:[#allocation2] sm:$0xff]
      %v620 = vld [vmem:[#allocation2 + $0x8] sm:$0xf]
      %v623 = vcombine.high %v619, %v619
      %624 = vrot.lane.b32.xlu0 %v619, 1
      %v625 = vpop.permute.xlu0 %624
      %626 = vrot.lane.b32.xlu0 %v623, 1
      %v627 = vpop.permute.xlu0 %626
      %628 = vrot.lane.b32.xlu0 %v620, 1
      %v629 = vpop.permute.xlu0 %628
      %v630 = vsel %vm351, %v625, %v627
      %v631 = vsel %vm351, %v627, %v629
      %v634 = vsel %vm269, %v630, 0.0
      %v635 = vsel %vm270, %v631, 0.0
      %v638 = vrot.slane %v634, 4
      %v639 = vrot.slane %v635, 4
      %642 = vst [vmem:[#allocation3 + $0x10] sm:$0xf0] %v638
      %643 = vst [vmem:[#allocation3 + $0x18] sm:$0xf0] %v639
      %v644 = vld [vmem:[#allocation2 + $0x4] sm:$0xff]
      %v646 = vcombine.high %v644, %v644
      %648 = vst [vmem:[#allocation3 + $0x20] sm:$0xf] %v644
      %649 = vst [vmem:[#allocation3 + $0x28] sm:$0xf] %v646
      %v650 = vld [vmem:[#allocation2 + $0x4] sm:$0xff]
      %v651 = vld [vmem:[#allocation2 + $0xc] sm:$0xf]
      %v654 = vcombine.high %v650, %v650
      %655 = vrot.lane.b32.xlu0 %v650, 127
      %v656 = vpop.permute.xlu0 %655
      %657 = vrot.lane.b32.xlu0 %v654, 127
      %v658 = vpop.permute.xlu0 %657
      %659 = vrot.lane.b32.xlu0 %v651, 127
      %v660 = vpop.permute.xlu0 %659
      %v661 = vsel %vm383, %v656, %v658
      %v662 = vsel %vm383, %v658, %v660
      %v665 = vsel %vm320, %v661, 0.0
      %v666 = vsel %vm321, %v662, 0.0
      %v669 = vrot.slane %v665, 4
      %v670 = vrot.slane %v666, 4
      %673 = vst [vmem:[#allocation3 + $0x20] sm:$0xf0] %v669
      %674 = vst [vmem:[#allocation3 + $0x28] sm:$0xf0] %v670
      %v675 = vld [vmem:[#allocation2 + $0x4] sm:$0xff]
      %v676 = vld [vmem:[#allocation2 + $0xc] sm:$0xf]
      %v679 = vcombine.high %v675, %v675
      %680 = vrot.lane.b32.xlu0 %v675, 113
      %v681 = vpop.permute.xlu0 %680
      %682 = vrot.lane.b32.xlu0 %v679, 113
      %v683 = vpop.permute.xlu0 %682
      %684 = vrot.lane.b32.xlu0 %v676, 113
      %v685 = vpop.permute.xlu0 %684
      %v686 = vsel %vm409, %v681, %v683
      %v687 = vsel %vm409, %v683, %v685
      %v690 = vsel %vm269, %v686, 0.0
      %v691 = vsel %vm270, %v687, 0.0
      %692 = vst [vmem:[#allocation3 + $0x30] sm:$0xf] %v690
      %693 = vst [vmem:[#allocation3 + $0x38] sm:$0xf] %v691
      %v694 = vld [vmem:[#allocation2 + $0x4] sm:$0xff]
      %v695 = vld [vmem:[#allocation2 + $0xc] sm:$0xf]
      %v698 = vcombine.low %v694, %v694
      %v699 = vcombine.low %v695, %v695
      %700 = vrot.lane.b32.xlu0 %v698, 112
      %v701 = vpop.permute.xlu0 %700
      %702 = vrot.lane.b32.xlu0 %v694, 112
      %v703 = vpop.permute.xlu0 %702
      %704 = vrot.lane.b32.xlu0 %v699, 112
      %v705 = vpop.permute.xlu0 %704
      %v706 = vsel %vm430, %v701, %v703
      %v707 = vsel %vm430, %v703, %v705
      %710 = vst [vmem:[#allocation3 + $0x30] sm:$0xf0] %v706
      %711 = vst [vmem:[#allocation3 + $0x38] sm:$0xf0] %v707
      %v712 = vld [vmem:[#allocation2 + $0x4] sm:$0xff]
      %v713 = vld [vmem:[#allocation2 + $0xc] sm:$0xf]
      %v716 = vcombine.high %v712, %v712
      %717 = vrot.lane.b32.xlu0 %v712, 111
      %v718 = vpop.permute.xlu0 %717
      %719 = vrot.lane.b32.xlu0 %v716, 111
      %v720 = vpop.permute.xlu0 %719
      %721 = vrot.lane.b32.xlu0 %v713, 111
      %v722 = vpop.permute.xlu0 %721
      %v723 = vsel %vm448, %v718, %v720
      %v724 = vsel %vm448, %v720, %v722
      %v727 = vsel %vm320, %v723, 0.0
      %v728 = vsel %vm321, %v724, 0.0
      %729 = vst [vmem:[#allocation3 + $0x40] sm:$0xf] %v727
      %730 = vst [vmem:[#allocation3 + $0x48] sm:$0xf] %v728
      %v731 = vld [vmem:[%s4] sm:$0xf]
      %v732 = vld [vmem:[#allocation3] sm:$0xff]
      %v733 = vld [vmem:[#allocation3 + $0x8] sm:$0xff]
      %v734 = vld [vmem:[#allocation3 + $0x10] sm:$0xff]
      %v735 = vld [vmem:[#allocation3 + $0x18] sm:$0xff]
      %v736 = vld [vmem:[#allocation3 + $0x20] sm:$0xff]
      %v737 = vld [vmem:[#allocation3 + $0x28] sm:$0xff]
      %v738 = vld [vmem:[#allocation3 + $0x30] sm:$0xff]
      %v739 = vld [vmem:[#allocation3 + $0x38] sm:$0xff]
      %v740 = vld [vmem:[#allocation3 + $0x40] sm:$0xf]
      %v741 = vld [vmem:[#allocation3 + $0x48] sm:$0xf]
      %v742 = vld [vmem:[%s5] sm:$0xf]
      %744 = vset.pattern.permute.xlu0 0
      %745 = vperm.xlu0 %744, %v742
      %v746 = vpop.permute.xlu0 %745
      %v749 = vsel %vm474, %v731, 0
      %v752 = vsel %vm478, %v740, 0
      %v755 = vsel %vm478, %v741, 0
      %757 = vmatprep.subr.mxu0 0.0
      %758 = vmatpush1.msra.mxu0 0.0
      %759 = vmatprep.subr.mxu0 0.0
      %760 = vmatpush1.msra.mxu0 0.0
      %761 = vmatprep.subr.mxu0 0.0
      %762 = vmatpush1.msra.mxu0 0.0
      %763 = vmatprep.subr.mxu0 0.0
      %764 = vmatpush1.msra.mxu0 0.0
      %765 = vmatprep.subr.mxu0 0.0
      %766 = vmatpush1.msra.mxu0 0.0
      %767 = vmatprep.subr.mxu0 0.0
      %768 = vmatpush1.msra.mxu0 0.0
      %769 = vmatprep.subr.mxu0 0.0
      %770 = vmatpush1.msra.mxu0 0.0
      %771 = vmatprep.subr.mxu0 0.0
      %772 = vmatpush1.msra.mxu0 0.0
      %773 = vmatprep.subr.mxu0 0.0
      %774 = vmatpush1.msra.mxu0 0.0
      %775 = vmatprep.subr.mxu0 0.0
      %776 = vmatpush1.msra.mxu0 0.0
      %777 = vmatprep.subr.mxu0 0.0
      %778 = vmatpush1.msra.mxu0 0.0
      %779 = vmatprep.subr.mxu0 %v755
      %780 = vmatpush1.msra.mxu0 %v752
      %781 = vmatprep.subr.mxu0 %v739
      %782 = vmatpush1.msra.mxu0 %v738
      %783 = vmatprep.subr.mxu0 %v737
      %784 = vmatpush1.msra.mxu0 %v736
      %785 = vmatprep.subr.mxu0 %v735
      %786 = vmatpush1.msra.mxu0 %v734
      %787 = vmatprep.subr.mxu0 %v733
      %788 = vmatpush1.msra.mxu0 %v732
      %789 = vmatprep.subr.mxu0 0.0
      %790 = vmatpush2.msra.mxu0 0.0
      %791 = vmatprep.subr.mxu0 0.0
      %792 = vmatpush2.msra.mxu0 0.0
      %793 = vmatprep.subr.mxu0 0.0
      %794 = vmatpush2.msra.mxu0 0.0
      %795 = vmatprep.subr.mxu0 0.0
      %796 = vmatpush2.msra.mxu0 0.0
      %797 = vmatprep.subr.mxu0 0.0
      %798 = vmatpush2.msra.mxu0 0.0
      %799 = vmatprep.subr.mxu0 0.0
      %800 = vmatpush2.msra.mxu0 0.0
      %801 = vmatprep.subr.mxu0 0.0
      %802 = vmatpush2.msra.mxu0 0.0
      %803 = vmatprep.subr.mxu0 0.0
      %804 = vmatpush2.msra.mxu0 0.0
      %805 = vmatprep.subr.mxu0 0.0
      %806 = vmatpush2.msra.mxu0 0.0
      %807 = vmatprep.subr.mxu0 0.0
      %808 = vmatpush2.msra.mxu0 0.0
      %809 = vmatprep.subr.mxu0 0.0
      %810 = vmatpush2.msra.mxu0 0.0
      %811 = vmatprep.subr.mxu0 0.0
      %812 = vmatpush2.msra.mxu0 0.0
      %813 = vmatprep.subr.mxu0 0.0
      %814 = vmatpush2.msra.mxu0 0.0
      %815 = vmatprep.subr.mxu0 0.0
      %816 = vmatpush2.msra.mxu0 0.0
      %817 = vmatprep.subr.mxu0 0.0
      %818 = vmatpush2.msra.mxu0 0.0
      %819 = vmatprep.subr.mxu0 0.0
      %820 = vmatpush2.msra.mxu0 0.0
      %821 = vmatprep.mubr.f32.mxu0 0.0
      %822 = vmatmul.mubr.f32.gmra.mxu0 %v749
      %v823 = vpop.f32.mrf.mxu0
      %v824 = vadd.f32 %v746, %v823
      %v825 = vpop.f32.mrf.mxu0
      %v826 = vadd.f32 %v746, %v825
      %827 = vdwg.mxu0
      %v830 = vcombine.low %v824, %v826
      %v832 = vadd.f32 %v254, %v830
      %v833 = vmax.f32 %v832, 0.0
      %834 = vst [vmem:[%s251] sm:$0xff] %v833
      %p835 = scmp.lt.s32.totalorder %s17, 1
      %s836 = scalar_select %p835, %s17, 1
      %s837 = smul.addr %s836, 2
      %s838 = smul.addr %s837, 4
      %s839 = scalar_lea.vmem %s6, %s838
      // Predicated region
      $region45: #{residual_block.1} parent=43 // pred_check
        %p840 = pneg %p166
      $region46: #{residual_block.1} parent=43 // pred_check_branch
        %842 = sbr.rel (%p840) target = $region48
      $region47: #{residual_block.1} parent=43 // pred_region
        _
      $region48: #{residual_block.1} parent=43 // pred_fallthru
        _
    $region44: #{residual_block.1} parent=5 // pred_fallthru
      _
    %p843 = scmp.le.s32.totalorder 2, %s12
    // Predicated region
    $region49: #{residual_block.1} parent=5 // pred_check
      %p844 = pneg %p843
    $region50: #{residual_block.1} parent=5 // pred_check_branch
      %846 = sbr.rel (%p844) target = $region52
    $region51: #{residual_block.1} parent=5 // pred_region
      %s847 = ssub.s32 %s12, 2
      // Predicated region
      $region53: #{residual_block.1} parent=51 // pred_check
        %p848 = pneg %p172
      $region54: #{residual_block.1} parent=51 // pred_check_branch
        %850 = sbr.rel (%p848) target = $region56
      $region55: #{residual_block.1} parent=51 // pred_region
        %p851 = scmp.lt.s32.totalorder %s18, 1
        %s852 = scalar_select %p851, %s18, 1
        %s853 = smul.addr %s852, 2
        %s854 = smul.addr %s853, 4
        %s855 = scalar_lea.vmem %s6, %s854
      $region56: #{residual_block.1} parent=51 // pred_fallthru
        _
    $region52: #{residual_block.1} parent=5 // pred_fallthru
      _
  $region6: #{residual_block.1} parent=0 // loop_footer
    %s16 = sadd.s32 1, %s12
  $region7: #{residual_block.1} parent=0 // loop_footer_branch
    %11 = sbr.rel target = $region3
  $region8: #{residual_block.1} parent=0 // loop_exit
    _

</llo_original>
